<compile_context>
chip_gen: v7x
topology: tpu7x:2x2x1
jax: 0.10.0
libtpu: 0.0.40
codegen_flags: <defaults>
</compile_context>

<pallas_src>
import jax
import jax.numpy as jnp
from jax.experimental import pallas as pl
from jax.experimental.pallas import tpu as pltpu


def _norm_kernel(x_ref, shift_ref, scale_ref, o_ref):
    # x_ref/o_ref: (rb, cb) lane-dense tile of the flattened image.
    # shift_ref/scale_ref: (rb, 1) f32 per-row constants (mean, 1/std) that
    # broadcast along lanes essentially for free.  Math in f32, cast at end.
    x = x_ref[...].astype(jnp.float32)
    o_ref[...] = ((x - shift_ref[...]) * scale_ref[...]).astype(o_ref.dtype)


def _tile_budget_bytes():
    """Single-tile byte budget; in-flight VMEM ~= 4x (double-buffered in+out)."""
    try:
        kind = jax.devices()[0].device_kind.lower()
    except Exception:
        kind = ""
    if "v5" in kind:
        # v5e scoped-VMEM default is 16 MiB -> keep 4x tile <= ~12 MiB.
        return 3 << 20
    # v6e / v7x: 32 MiB scoped-VMEM default -> 4 MiB tiles (16 MiB in flight),
    # also safely under the v7x 64 MiB physical VMEM.
    return 4 << 20


def _round_down(x, m):
    return max(m, (x // m) * m)


def _round_up(x, m):
    return ((x + m - 1) // m) * m


def normalization(img, mean, std):
    """(img - mean) / std with per-channel mean/std, NCHW layout."""
    N, C, H, W = img.shape
    dtype = img.dtype
    itemsize = jnp.dtype(dtype).itemsize

    rows = N * C
    cols = H * W

    # Free reshape for contiguous NCHW: each row is one (n, c) channel plane.
    x2 = img.reshape(rows, cols)

    # Per-row (N*C, 1) shift/scale columns in float32 (row index = n*C + c).
    mean_c = jnp.asarray(mean, dtype=jnp.float32).reshape(-1)
    inv_std_c = 1.0 / jnp.asarray(std, dtype=jnp.float32).reshape(-1)
    shift = jnp.tile(mean_c, N).reshape(rows, 1)
    scale = jnp.tile(inv_std_c, N).reshape(rows, 1)

    # --- Block sizing -------------------------------------------------------
    budget = _tile_budget_bytes()
    # Sublane multiple per dtype (f32: 8, bf16/f16: 16, int8/fp8: 32).
    sub = {4: 8, 2: 16, 1: 32}.get(itemsize, 8)

    row_bytes = cols * itemsize
    if row_bytes <= budget:
        # Preferred path: full-width column blocks, row-only tiling.
        cb = cols
        rb = budget // row_bytes
        if rb >= rows:
            rb = rows
        else:
            rb = _round_down(rb, sub)
        # Ensure >=2 parallel grid steps (v7x megacore) when a legal split exists.
        if rb >= rows and rows >= 2 * sub:
            rb = min(_round_up(-(-rows // 2), sub), _round_down(rows - 1, sub))
    else:
        # A single full-width row block exceeds the budget: tile columns too.
        rb = min(rows, sub)
        cb = _round_down(budget // max(1, rb * itemsize), 128)

    grid = (pl.cdiv(rows, rb), pl.cdiv(cols, cb))

    out2 = pl.pallas_call(
        _norm_kernel,
        out_shape=jax.ShapeDtypeStruct((rows, cols), dtype),
        grid=grid,  # column axis innermost: (rb, 1) operands not re-fetched
        in_specs=[
            pl.BlockSpec((rb, cb), lambda i, j: (i, j)),
            pl.BlockSpec((rb, 1), lambda i, j: (i, 0)),
            pl.BlockSpec((rb, 1), lambda i, j: (i, 0)),
        ],
        out_specs=pl.BlockSpec((rb, cb), lambda i, j: (i, j)),
        compiler_params=pltpu.CompilerParams(
            dimension_semantics=("parallel", "parallel"),
        ),
    )(x2, shift, scale)

    return out2.reshape(N, C, H, W)


if __name__ == "__main__":
    # Small, deterministic example consistent with the module:
    # batch=2, channels=4, spatial=16x16.
    N, C, H, W = 2, 4, 16, 16

    key = jax.random.PRNGKey(0)
    img = jax.random.uniform(key, (N, C, H, W), dtype=jnp.float32)

    # Deterministic per-channel normalization constants (like __init__ args).
    mean = jnp.array([0.485, 0.456, 0.406, 0.500], dtype=jnp.float32)
    std = jnp.array([0.229, 0.224, 0.225, 0.250], dtype=jnp.float32)

    out = normalization(img, mean, std)
    out = jax.block_until_ready(out)

    # Reference check in plain JAX (same broadcasting as PyTorch).
    ref = (img - mean.reshape(-1, 1, 1)) / std.reshape(-1, 1, 1)
    assert out.shape == img.shape and out.dtype == img.dtype
    assert jnp.allclose(out, ref, atol=1e-6, rtol=1e-6)

    print("KERNEL_OK")
</pallas_src>

<mosaic_0001>
module attributes {stable_mosaic.version = 11 : i64} {
  func.func @_norm_kernel(%arg0: i32, %arg1: i32, %arg2: memref<8x256xf32, #tpu.memory_space<vmem>>, %arg3: memref<8x1xf32, #tpu.memory_space<vmem>>, %arg4: memref<8x1xf32, #tpu.memory_space<vmem>>, %arg5: memref<8x256xf32, #tpu.memory_space<vmem>>) attributes {dimension_semantics = [#tpu.dimension_semantics<parallel>, #tpu.dimension_semantics<parallel>], iteration_bounds = array<i64: 1, 1>, scalar_prefetch = 0 : i64, scratch_operands = 0 : i64, tpu.core_type = #tpu.core_type<tc>, window_params = [{transform_indices = @transform_0, window_bounds = array<i64: 8, 256>}, {transform_indices = @transform_1, window_bounds = array<i64: 8, 1>}, {transform_indices = @transform_2, window_bounds = array<i64: 8, 1>}, {transform_indices = @transform_3, window_bounds = array<i64: 8, 256>}]} {
    %c0 = arith.constant 0 : index
    %c0_0 = arith.constant 0 : index
    %0 = vector.load %arg2[%c0, %c0_0] : memref<8x256xf32, #tpu.memory_space<vmem>>, vector<8x256xf32>
    %c0_1 = arith.constant 0 : index
    %c0_2 = arith.constant 0 : index
    %1 = vector.load %arg3[%c0_1, %c0_2] : memref<8x1xf32, #tpu.memory_space<vmem>>, vector<8x1xf32>
    %2 = vector.broadcast %1 : vector<8x1xf32> to vector<8x256xf32>
    %3 = arith.subf %0, %2 : vector<8x256xf32>
    %c0_3 = arith.constant 0 : index
    %c0_4 = arith.constant 0 : index
    %4 = vector.load %arg4[%c0_3, %c0_4] : memref<8x1xf32, #tpu.memory_space<vmem>>, vector<8x1xf32>
    %5 = vector.broadcast %4 : vector<8x1xf32> to vector<8x256xf32>
    %6 = arith.mulf %3, %5 : vector<8x256xf32>
    %c0_5 = arith.constant 0 : index
    %c0_6 = arith.constant 0 : index
    %7 = vector.load %arg5[%c0_5, %c0_6] : memref<8x256xf32, #tpu.memory_space<vmem>>, vector<8x256xf32>
    tpu.vector_store %arg5[%c0_5, %c0_6], %6 {strides = array<i32>} : memref<8x256xf32, #tpu.memory_space<vmem>>, vector<8x256xf32>,
    return
  }
  func.func @transform_0(%arg0: i32, %arg1: i32) -> (i32, i32) {
    %c0_i32 = arith.constant 0 : i32
    return %arg0, %arg1 : i32, i32
  }
  func.func @transform_1(%arg0: i32, %arg1: i32) -> (i32, i32) {
    %c0_i32 = arith.constant 0 : i32
    %c0_i32_0 = arith.constant 0 : i32
    return %arg0, %c0_i32 : i32, i32
  }
  func.func @transform_2(%arg0: i32, %arg1: i32) -> (i32, i32) {
    %c0_i32 = arith.constant 0 : i32
    %c0_i32_0 = arith.constant 0 : i32
    return %arg0, %c0_i32 : i32, i32
  }
  func.func @transform_3(%arg0: i32, %arg1: i32) -> (i32, i32) {
    %c0_i32 = arith.constant 0 : i32
    return %arg0, %arg1 : i32, i32
  }
}

</mosaic_0001>

<llo_original>
// kernel: tpu_custom_call.1
$region0: #{tpu_custom_call.1}
  #allocation0 [shape = 'u32[]', space=smem, size = 0x4, offset = 0x4, fixed_abs, tag = 'smem constant byte address 0x4 - core index']
  #allocation1 [shape = 'u32[144,128]{1,0:T(1,128)}', space=vmem, size = 0x12000, scoped, tag = 'internal scratch']
  %s0 = inlined_call_operand.vmem [shape: f32[8,256], index: 0, kind: input, shape index: {}]
  %s1 = inlined_call_operand.vmem [shape: f32[8,1], index: 1, kind: input, shape index: {}]
  %s2 = inlined_call_operand.vmem [shape: f32[8,1], index: 2, kind: input, shape index: {}]
  %s3 = inlined_call_operand.hbm [shape: f32[8,256], index: 3, kind: output, shape index: {}]
  %s4 = sld [smem:[#allocation0]]
  $region22: #{tpu_custom_call.1} parent=0
    _
  %s6 = ssub.s32 1, %s4
  %s7 = scalar_select 0, %s6, %s4
  $region1: #{tpu_custom_call.1} parent=0
    #allocation2 [shape = 'u8[8192]{0}', space=vmem, size = 0x2000, scoped, tag = 'output window, operand 0, single buffered']
    #allocation3 [shape = 's32[1]{0}', space=sflag, size = 0x4, scoped, tag = 'scoped memory for tpu_custom_call.1']
    %8 = vsyncpa [#allocation3], 0
    // Predicated region
    $region2: #{tpu_custom_call.1} parent=1 // pred_check
      _
    $region3: #{tpu_custom_call.1} parent=1 // pred_check_branch
      %10 = sbr.rel (0) target = $region5
    $region4: #{tpu_custom_call.1} parent=1 // pred_region
      _
    $region5: #{tpu_custom_call.1} parent=1 // pred_fallthru
      _
    // Predicated region
    $region6: #{tpu_custom_call.1} parent=1 // pred_check
      _
    $region7: #{tpu_custom_call.1} parent=1 // pred_check_branch
      %12 = sbr.rel (0) target = $region9
    $region8: #{tpu_custom_call.1} parent=1 // pred_region
      _
    $region9: #{tpu_custom_call.1} parent=1 // pred_fallthru
      _
    // Predicated region
    $region10: #{tpu_custom_call.1} parent=1 // pred_check
      _
    $region11: #{tpu_custom_call.1} parent=1 // pred_check_branch
      %14 = sbr.rel (0) target = $region13
    $region12: #{tpu_custom_call.1} parent=1 // pred_region
      _
    $region13: #{tpu_custom_call.1} parent=1 // pred_fallthru
      _
    %v15 = vld [vmem:[%s0] sm:$0xff]
    %v16 = vld [vmem:[%s0 + $0x8] sm:$0xff]
    %v17 = vld [vmem:[%s1] sm:$0xff]
    %19 = vset.pattern.permute.xlu0 0
    %20 = vperm.xlu0 %19, %v17
    %v21 = vpop.permute.xlu0 %20
    %v23 = vsub.f32 %v15, %v21
    %v24 = vsub.f32 %v16, %v21
    %v25 = vld [vmem:[%s2] sm:$0xff]
    %27 = vset.pattern.permute.xlu0 0
    %28 = vperm.xlu0 %27, %v25
    %v29 = vpop.permute.xlu0 %28
    %v31 = vmul.f32 %v23, %v29
    %v32 = vmul.f32 %v24, %v29
    %33 = vst [vmem:[#allocation2] sm:$0xff] %v31
    %34 = vst [vmem:[#allocation2 + $0x8] sm:$0xff] %v32
    // Predicated region
    $region14: #{tpu_custom_call.1} parent=1 // pred_check
      _
    $region15: #{tpu_custom_call.1} parent=1 // pred_check_branch
      %36 = sbr.rel (0) target = $region17
    $region16: #{tpu_custom_call.1} parent=1 // pred_region
      %s38 = ssub.s32 256, 256
      %39 = vsyncadd [#allocation3], %s38
      %s41 = sshll.u32 [#allocation2], 4
      %s42 = int_to_ptr.vmem [resolvable:$true] %s41
      %44 = dma.vmem_to_hbm [thread:$0]  %s42, 256, %s3, [#allocation3]
    $region17: #{tpu_custom_call.1} parent=1 // pred_fallthru
      _
    // Predicated region
    $region18: #{tpu_custom_call.1} parent=1 // pred_check
      _
    $region19: #{tpu_custom_call.1} parent=1 // pred_check_branch
      %46 = sbr.rel (0) target = $region21
    $region20: #{tpu_custom_call.1} parent=1 // pred_region
      %47 = dma.done [#allocation3], 256
    $region21: #{tpu_custom_call.1} parent=1 // pred_fallthru
      _
    %48 = vsyncpa [#allocation3], 1

</llo_original>
